<compile_context>
chip_gen: v7x
topology: tpu7x:2x2x1
jax: 0.10.0
libtpu: 0.0.40
codegen_flags: <defaults>
</compile_context>

<pallas_src>
import functools

import jax
import jax.numpy as jnp
from jax.experimental import pallas as pl
from jax.experimental.pallas import tpu as pltpu

_LANES = 128
_SUBL = 8
_TILE = _LANES * _SUBL  # 1024 elements = one full (8, 128) vreg tile


def _dice_kernel(x_ref, t_ref, prod_ref, sum_ref, *, rows, bps, needs_mask):
    c = pl.program_id(0)   # split axis (TensorCore shard on v7x)
    j = pl.program_id(1)   # sequential reduction steps within the split

    @pl.when(j == 0)
    def _init():
        prod_ref[...] = jnp.zeros_like(prod_ref)
        sum_ref[...] = jnp.zeros_like(sum_ref)

    x = x_ref[...].astype(jnp.float32)
    t = t_ref[...].astype(jnp.float32)
    tr = x.shape[0]

    def accumulate(xv, tv):
        x3 = xv.reshape(tr // _SUBL, _SUBL, _LANES)
        t3 = tv.reshape(tr // _SUBL, _SUBL, _LANES)
        # Leading-axis sums are plain vreg adds (VALU); no XLU in the hot loop.
        prod_ref[...] += jnp.sum(x3 * t3, axis=0)
        sum_ref[...] += jnp.sum(x3, axis=0) + jnp.sum(t3, axis=0)

    if needs_mask:
        b = c * bps + j                    # intended (unclamped) block index
        is_full = (b + 1) * tr <= rows

        @pl.when(is_full)
        def _full():
            accumulate(x, t)

        @pl.when(jnp.logical_not(is_full))
        def _partial():
            # Edge-block rows beyond `rows` contain undefined data; zero them
            # before any arithmetic (select does not propagate NaN).
            gid = b * tr + jax.lax.broadcasted_iota(jnp.int32, x.shape, 0)
            valid = gid < rows
            accumulate(jnp.where(valid, x, 0.0), jnp.where(valid, t, 0.0))
    else:
        accumulate(x, t)


def _num_tensorcores():
    """2 TensorCores per chip on v7x; 1 on v5e/v6e."""
    try:
        kind = jax.devices()[0].device_kind.lower()
    except Exception:
        return 1
    if "v7" in kind or "7x" in kind:
        return 2
    return 1


def _vmem_capacity_bytes():
    try:
        info = pltpu.get_tpu_info()
        cap = getattr(info, "vmem_capacity_bytes", None)
        if cap:
            return int(cap)
    except Exception:
        pass
    # Fallback: 64 MiB per TC on v7x, 128 MiB on v5e/v6e.
    return (64 << 20) if _num_tensorcores() > 1 else (128 << 20)


def dice_loss_v2(inp, target, *, tile_rows=8192, num_splits=None):
    """Pallas implementation of DiceLossV2.forward. Returns a float32 scalar."""
    assert inp.shape == target.shape

    x_flat = jnp.ravel(inp)
    t_flat = jnp.ravel(target)
    n = x_flat.shape[0]

    # The kernel streams an exact lane-aligned (rows, 128) slab with rows a
    # multiple of 8; the ragged tail (< 1024 elements) is summed in the
    # epilogue instead of padding the whole array.
    if n < _TILE:
        # Tiny inputs: pad up to one (8, 128) tile (negligible copy).
        x_flat = jnp.pad(x_flat, (0, _TILE - n))
        t_flat = jnp.pad(t_flat, (0, _TILE - n))
        m_used = _TILE
        tail_len = 0
    else:
        m_used = (n // _TILE) * _TILE
        tail_len = n - m_used

    rows = m_used // _LANES                       # multiple of 8
    assert rows < 2 ** 31                         # int32 row mask in-kernel
    # For lane-aligned inputs this slice is a no-op (zero copy).
    # TODO(synk): an element-masked in-kernel tail path would avoid the head
    # copy for ragged n as well.
    x2 = x_flat[:m_used].reshape(rows, _LANES)
    t2 = t_flat[:m_used].reshape(rows, _LANES)

    num_tc = _num_tensorcores()
    if num_splits is None:
        num_splits = num_tc                       # 2 on v7x, 1 on v5e/v6e

    # Block rows: multiple of 8, capped by tile_rows; never shrink to tiny
    # blocks for awkward row counts (the ragged tail block is masked in-kernel).
    tr = max(_SUBL, (min(tile_rows, rows) // _SUBL) * _SUBL)
    total_blocks = pl.cdiv(rows, tr)
    nsplit = max(1, min(num_splits, total_blocks))
    bps = pl.cdiv(total_blocks, nsplit)           # blocks per split
    needs_mask = (nsplit * bps * tr) != rows
    last_block = total_blocks - 1

    def in_index(c, j):
        # Clamp so no block is fully out of bounds; duplicated blocks are
        # fully masked in-kernel via the intended (unclamped) row index.
        return (jnp.minimum(c * bps + j, last_block), 0)

    def out_index(c, j):
        return (c, 0)

    # 2 inputs x 2 pipeline buffers, plus accumulator/temporary headroom,
    # capped generation-aware at ~55% of physical VMEM.
    pipeline_bytes = 2 * tr * _LANES * (x2.dtype.itemsize + t2.dtype.itemsize)
    vmem_cap = _vmem_capacity_bytes()
    vmem_limit = int(min(max(pipeline_bytes + (8 << 20), 16 << 20),
                         int(0.55 * vmem_cap)))

    cost = pl.CostEstimate(
        flops=int(4 * rows * _LANES),
        transcendentals=0,
        bytes_accessed=int(rows * _LANES * (x2.dtype.itemsize + t2.dtype.itemsize)
                           + 2 * nsplit * _SUBL * _LANES * 4),
    )

    # Split axis semantics: CORE_PARALLEL so the split genuinely lands on both
    # TensorCores on v7x; plain "parallel" if a user forces a split on a
    # single-TC chip; "arbitrary" (size-1 axis) otherwise.
    if nsplit > 1 and num_tc > 1:
        split_sem = pltpu.CORE_PARALLEL
    elif nsplit > 1:
        split_sem = "parallel"
    else:
        split_sem = "arbitrary"

    kernel = functools.partial(
        _dice_kernel, rows=rows, bps=bps, needs_mask=needs_mask)

    prod_part, sum_part = pl.pallas_call(
        kernel,
        out_shape=(
            jax.ShapeDtypeStruct((nsplit * _SUBL, _LANES), jnp.float32),
            jax.ShapeDtypeStruct((nsplit * _SUBL, _LANES), jnp.float32),
        ),
        grid=(nsplit, bps),
        in_specs=[
            pl.BlockSpec((tr, _LANES), in_index),
            pl.BlockSpec((tr, _LANES), in_index),
        ],
        out_specs=(
            pl.BlockSpec((_SUBL, _LANES), out_index),
            pl.BlockSpec((_SUBL, _LANES), out_index),
        ),
        compiler_params=pltpu.CompilerParams(
            dimension_semantics=(split_sem, "arbitrary"),
            vmem_limit_bytes=vmem_limit,
        ),
        cost_estimate=cost,
    )(x2, t2)

    # Tiny epilogue: cross-lane reduce over (nsplit*8, 128) partials + ragged
    # tail (< 1024 elements) + final divide.
    sum_prod = jnp.sum(prod_part)
    sum_add = jnp.sum(sum_part)
    if tail_len:
        tx = x_flat[m_used:].astype(jnp.float32)
        tt = t_flat[m_used:].astype(jnp.float32)
        sum_prod = sum_prod + jnp.sum(tx * tt)
        sum_add = sum_add + jnp.sum(tx) + jnp.sum(tt)

    return 1.0 - 2.0 * sum_prod / (sum_add + 1e-07)


if __name__ == "__main__":
    key = jax.random.PRNGKey(0)
    k1, k2, k3, k4 = jax.random.split(key, 4)

    # (Batch, 1, H, W) probability maps, as the module docstring assumes.
    B, C, H, W = 2, 1, 64, 64
    inp = jax.nn.sigmoid(jax.random.normal(k1, (B, C, H, W), dtype=jnp.float32))
    tgt = (jax.random.uniform(k2, (B, C, H, W)) > 0.5).astype(jnp.float32)

    loss = jax.block_until_ready(jax.jit(dice_loss_v2)(inp, tgt))
    ref = 1.0 - 2.0 * jnp.sum(inp * tgt) / (jnp.sum(inp + tgt) + 1e-07)
    assert jnp.allclose(loss, ref, atol=1e-5, rtol=1e-5), (loss, ref)

    # Exercise the ragged-tail + masked partial-block path: 3200 elements
    # (tail of 128 handled in the epilogue) and a tile size that leaves a
    # partial final block (row-masked in-kernel).
    inp2 = jax.nn.sigmoid(jax.random.normal(k3, (2, 1, 40, 40), dtype=jnp.float32))
    tgt2 = (jax.random.uniform(k4, (2, 1, 40, 40)) > 0.5).astype(jnp.float32)
    loss2 = jax.block_until_ready(
        jax.jit(functools.partial(dice_loss_v2, tile_rows=16))(inp2, tgt2))
    ref2 = 1.0 - 2.0 * jnp.sum(inp2 * tgt2) / (jnp.sum(inp2 + tgt2) + 1e-07)
    assert jnp.allclose(loss2, ref2, atol=1e-5, rtol=1e-5), (loss2, ref2)

    print("KERNEL_OK")
</pallas_src>

<mosaic_0001>
module attributes {stable_mosaic.version = 11 : i64} {
  func.func @_dice_kernel(%arg0: i32, %arg1: i32, %arg2: memref<64x128xf32, #tpu.memory_space<vmem>>, %arg3: memref<64x128xf32, #tpu.memory_space<vmem>>, %arg4: memref<8x128xf32, #tpu.memory_space<vmem>>, %arg5: memref<8x128xf32, #tpu.memory_space<vmem>>) attributes {dimension_semantics = [#tpu.dimension_semantics<arbitrary>, #tpu.dimension_semantics<arbitrary>], iteration_bounds = array<i64: 1, 1>, scalar_prefetch = 0 : i64, scratch_operands = 0 : i64, tpu.core_type = #tpu.core_type<tc>, window_params = [{transform_indices = @transform_0, window_bounds = array<i64: 64, 128>}, {transform_indices = @transform_1, window_bounds = array<i64: 64, 128>}, {transform_indices = @transform_2, window_bounds = array<i64: 8, 128>}, {transform_indices = @transform_3, window_bounds = array<i64: 8, 128>}]} {
    %c0_i32 = arith.constant 0 : i32
    %0 = arith.cmpi eq, %arg1, %c0_i32 : i32
    %1 = arith.extui %0 : i1 to i32
    %c0_i32_0 = arith.constant 0 : i32
    %2 = arith.cmpi ne, %1, %c0_i32_0 : i32
    scf.if %2 {
      %cst_14 = arith.constant 0.000000e+00 : f32
      %18 = vector.broadcast %cst_14 : f32 to vector<8x128xf32>
      %c0_15 = arith.constant 0 : index
      %c0_16 = arith.constant 0 : index
      %19 = vector.load %arg4[%c0_15, %c0_16] : memref<8x128xf32, #tpu.memory_space<vmem>>, vector<8x128xf32>
      tpu.vector_store %arg4[%c0_15, %c0_16], %18 {strides = array<i32>} : memref<8x128xf32, #tpu.memory_space<vmem>>, vector<8x128xf32>,
      %cst_17 = arith.constant 0.000000e+00 : f32
      %20 = vector.broadcast %cst_17 : f32 to vector<8x128xf32>
      %c0_18 = arith.constant 0 : index
      %c0_19 = arith.constant 0 : index
      %21 = vector.load %arg5[%c0_18, %c0_19] : memref<8x128xf32, #tpu.memory_space<vmem>>, vector<8x128xf32>
      tpu.vector_store %arg5[%c0_18, %c0_19], %20 {strides = array<i32>} : memref<8x128xf32, #tpu.memory_space<vmem>>, vector<8x128xf32>,
    } else {
    }
    %c0 = arith.constant 0 : index
    %c0_1 = arith.constant 0 : index
    %3 = vector.load %arg2[%c0, %c0_1] : memref<64x128xf32, #tpu.memory_space<vmem>>, vector<64x128xf32>
    %c0_2 = arith.constant 0 : index
    %c0_3 = arith.constant 0 : index
    %4 = vector.load %arg3[%c0_2, %c0_3] : memref<64x128xf32, #tpu.memory_space<vmem>>, vector<64x128xf32>
    %5 = vector.shape_cast %3 : vector<64x128xf32> to vector<8x8x128xf32>
    %6 = vector.shape_cast %4 : vector<64x128xf32> to vector<8x8x128xf32>
    %c0_4 = arith.constant 0 : index
    %c0_5 = arith.constant 0 : index
    %7 = vector.load %arg4[%c0_4, %c0_5] : memref<8x128xf32, #tpu.memory_space<vmem>>, vector<8x128xf32>
    %8 = arith.mulf %5, %6 : vector<8x8x128xf32>
    %cst = arith.constant dense<0.000000e+00> : vector<8x128xf32>
    %9 = vector.multi_reduction <add>, %8, %cst [0] : vector<8x8x128xf32> to vector<8x128xf32>
    %10 = arith.addf %7, %9 : vector<8x128xf32>
    %c0_6 = arith.constant 0 : index
    %c0_7 = arith.constant 0 : index
    %11 = vector.load %arg4[%c0_6, %c0_7] : memref<8x128xf32, #tpu.memory_space<vmem>>, vector<8x128xf32>
    tpu.vector_store %arg4[%c0_6, %c0_7], %10 {strides = array<i32>} : memref<8x128xf32, #tpu.memory_space<vmem>>, vector<8x128xf32>,
    %c0_8 = arith.constant 0 : index
    %c0_9 = arith.constant 0 : index
    %12 = vector.load %arg5[%c0_8, %c0_9] : memref<8x128xf32, #tpu.memory_space<vmem>>, vector<8x128xf32>
    %cst_10 = arith.constant dense<0.000000e+00> : vector<8x128xf32>
    %13 = vector.multi_reduction <add>, %5, %cst_10 [0] : vector<8x8x128xf32> to vector<8x128xf32>
    %cst_11 = arith.constant dense<0.000000e+00> : vector<8x128xf32>
    %14 = vector.multi_reduction <add>, %6, %cst_11 [0] : vector<8x8x128xf32> to vector<8x128xf32>
    %15 = arith.addf %13, %14 : vector<8x128xf32>
    %16 = arith.addf %12, %15 : vector<8x128xf32>
    %c0_12 = arith.constant 0 : index
    %c0_13 = arith.constant 0 : index
    %17 = vector.load %arg5[%c0_12, %c0_13] : memref<8x128xf32, #tpu.memory_space<vmem>>, vector<8x128xf32>
    tpu.vector_store %arg5[%c0_12, %c0_13], %16 {strides = array<i32>} : memref<8x128xf32, #tpu.memory_space<vmem>>, vector<8x128xf32>,
    return
  }
  func.func @transform_0(%arg0: i32, %arg1: i32) -> (i32, i32) {
    %c1_i32 = arith.constant 1 : i32
    %0 = arith.muli %arg0, %c1_i32 : i32
    %1 = arith.addi %0, %arg1 : i32
    %c0_i32 = arith.constant 0 : i32
    %2 = arith.minsi %1, %c0_i32 : i32
    %c0_i32_0 = arith.constant 0 : i32
    %c0_i32_1 = arith.constant 0 : i32
    return %2, %c0_i32_0 : i32, i32
  }
  func.func @transform_1(%arg0: i32, %arg1: i32) -> (i32, i32) {
    %c1_i32 = arith.constant 1 : i32
    %0 = arith.muli %arg0, %c1_i32 : i32
    %1 = arith.addi %0, %arg1 : i32
    %c0_i32 = arith.constant 0 : i32
    %2 = arith.minsi %1, %c0_i32 : i32
    %c0_i32_0 = arith.constant 0 : i32
    %c0_i32_1 = arith.constant 0 : i32
    return %2, %c0_i32_0 : i32, i32
  }
  func.func @transform_2(%arg0: i32, %arg1: i32) -> (i32, i32) {
    %c0_i32 = arith.constant 0 : i32
    %c0_i32_0 = arith.constant 0 : i32
    return %arg0, %c0_i32 : i32, i32
  }
  func.func @transform_3(%arg0: i32, %arg1: i32) -> (i32, i32) {
    %c0_i32 = arith.constant 0 : i32
    %c0_i32_0 = arith.constant 0 : i32
    return %arg0, %c0_i32 : i32, i32
  }
}

</mosaic_0001>

<llo_original>
// kernel: dice_loss_v2.1
$region0: #{dice_loss_v2.1}
  #allocation0 [shape = 'u32[]', space=smem, size = 0x4, offset = 0x4, fixed_abs, tag = 'smem constant byte address 0x4 - core index']
  #allocation1 [shape = 'u32[144,128]{1,0:T(1,128)}', space=vmem, size = 0x12000, scoped, tag = 'internal scratch']
  %s0 = inlined_call_operand.vmem [shape: f32[64,128], index: 0, kind: input, shape index: {}]
  %s1 = inlined_call_operand.vmem [shape: f32[64,128], index: 1, kind: input, shape index: {}]
  %s2 = inlined_call_operand.vmem [shape: f32[8,128], index: 2, kind: output, shape index: {0}]
  %s3 = inlined_call_operand.vmem [shape: f32[8,128], index: 3, kind: output, shape index: {1}]
  %4 = xla_tuple %s2, %s3
  %s5 = sld [smem:[#allocation0]]
  $region30: #{dice_loss_v2.1} parent=0
    _
  %s7 = ssub.s32 1, %s5
  %s8 = scalar_select 0, %s7, %s5
  // Predicated region
  $region2: #{dice_loss_v2.1} parent=0 // pred_check
    _
  $region3: #{dice_loss_v2.1} parent=0 // pred_check_branch
    %10 = sbr.rel (0) target = $region5
  $region4: #{dice_loss_v2.1} parent=0 // pred_region
    %s11 = sadd.s32 0, 0
    %p12 = scmp.lt.s32.totalorder %s11, 0
    %s13 = scalar_select %p12, %s11, 0
    %s14 = smul.u32 8, %s13
    %p15 = scmp.lt.s32.totalorder %s14, 7
    %s16 = scalar_select %p15, %s14, 7
    %s17 = smul.addr %s16, 8
    %s18 = scalar_lea.vmem %s0, %s17
    %s19 = sadd.s32 0, 0
    %p20 = scmp.lt.s32.totalorder %s19, 0
    %s21 = scalar_select %p20, %s19, 0
    %s22 = smul.u32 8, %s21
  $region5: #{dice_loss_v2.1} parent=0 // pred_fallthru
    _
  // Predicated region
  $region6: #{dice_loss_v2.1} parent=0 // pred_check
    _
  $region7: #{dice_loss_v2.1} parent=0 // pred_check_branch
    %24 = sbr.rel (0) target = $region9
  $region8: #{dice_loss_v2.1} parent=0 // pred_region
    %s25 = sadd.s32 0, 0
    %p26 = scmp.lt.s32.totalorder %s25, 0
    %s27 = scalar_select %p26, %s25, 0
    %s28 = smul.u32 8, %s27
    %p29 = scmp.lt.s32.totalorder %s28, 7
    %s30 = scalar_select %p29, %s28, 7
    %s31 = smul.addr %s30, 8
    %s32 = scalar_lea.vmem %s1, %s31
    %s33 = sadd.s32 0, 0
    %p34 = scmp.lt.s32.totalorder %s33, 0
    %s35 = scalar_select %p34, %s33, 0
    %s36 = smul.u32 8, %s35
  $region9: #{dice_loss_v2.1} parent=0 // pred_fallthru
    _
  %s37 = sadd.s32 0, 0
  %p38 = scmp.lt.s32.totalorder %s37, 0
  %s39 = scalar_select %p38, %s37, 0
  %s40 = smul.u32 8, %s39
  %p41 = scmp.lt.s32.totalorder %s40, 7
  %s42 = scalar_select %p41, %s40, 7
  %s43 = smul.addr %s42, 8
  %s44 = scalar_lea.vmem %s0, %s43
  %s45 = sadd.s32 0, 0
  %p46 = scmp.lt.s32.totalorder %s45, 0
  %s47 = scalar_select %p46, %s45, 0
  %s48 = smul.u32 8, %s47
  %p49 = scmp.lt.s32.totalorder %s48, 7
  %s50 = scalar_select %p49, %s48, 7
  %s51 = smul.addr %s50, 8
  %s52 = scalar_lea.vmem %s1, %s51
  %s53 = sadd.s32 0, 0
  %p54 = scmp.lt.s32.totalorder %s53, 0
  %s55 = scalar_select %p54, %s53, 0
  %s56 = smul.u32 8, %s55
  %p57 = scmp.lt.s32.totalorder %s56, 7
  %s58 = scalar_select %p57, %s56, 7
  %s59 = smul.addr %s58, 8
  %s60 = scalar_lea.vmem %s0, %s59
  %s61 = sadd.s32 0, 0
  %p62 = scmp.lt.s32.totalorder %s61, 0
  %s63 = scalar_select %p62, %s61, 0
  %s64 = smul.u32 8, %s63
  %s65 = sadd.s32 0, 0
  %p66 = scmp.lt.s32.totalorder %s65, 0
  %s67 = scalar_select %p66, %s65, 0
  %s68 = smul.u32 8, %s67
  %p69 = scmp.lt.s32.totalorder %s68, 7
  %s70 = scalar_select %p69, %s68, 7
  %s71 = smul.addr %s70, 8
  %s72 = scalar_lea.vmem %s1, %s71
  %s73 = sadd.s32 0, 0
  %p74 = scmp.lt.s32.totalorder %s73, 0
  %s75 = scalar_select %p74, %s73, 0
  %s76 = smul.u32 8, %s75
  %p77 = scmp.eq.s32.totalorder 0, 0
  // Predicated region
  $region10: #{dice_loss_v2.1} parent=0 // pred_check
    %p78 = pneg %p77
  $region11: #{dice_loss_v2.1} parent=0 // pred_check_branch
    %80 = sbr.rel (%p78) target = $region13
  $region12: #{dice_loss_v2.1} parent=0 // pred_region
    %81 = vst [vmem:[%s2] sm:$0xff] 0.0
    %82 = vst [vmem:[%s3] sm:$0xff] 0.0
  $region13: #{dice_loss_v2.1} parent=0 // pred_fallthru
    _
  %v83 = vld [vmem:[%s60] sm:$0xff]
  %v84 = vld [vmem:[%s60 + $0x8] sm:$0xff]
  %v85 = vld [vmem:[%s60 + $0x10] sm:$0xff]
  %v86 = vld [vmem:[%s60 + $0x18] sm:$0xff]
  %v87 = vld [vmem:[%s60 + $0x20] sm:$0xff]
  %v88 = vld [vmem:[%s60 + $0x28] sm:$0xff]
  %v89 = vld [vmem:[%s60 + $0x30] sm:$0xff]
  %v90 = vld [vmem:[%s60 + $0x38] sm:$0xff]
  %v91 = vld [vmem:[%s72] sm:$0xff]
  %v92 = vld [vmem:[%s72 + $0x8] sm:$0xff]
  %v93 = vld [vmem:[%s72 + $0x10] sm:$0xff]
  %v94 = vld [vmem:[%s72 + $0x18] sm:$0xff]
  %v95 = vld [vmem:[%s72 + $0x20] sm:$0xff]
  %v96 = vld [vmem:[%s72 + $0x28] sm:$0xff]
  %v97 = vld [vmem:[%s72 + $0x30] sm:$0xff]
  %v98 = vld [vmem:[%s72 + $0x38] sm:$0xff]
  %v99 = vld [vmem:[%s2] sm:$0xff]
  %v100 = vmul.f32 %v83, %v91
  %v101 = vmul.f32 %v84, %v92
  %v102 = vmul.f32 %v85, %v93
  %v103 = vmul.f32 %v86, %v94
  %v104 = vmul.f32 %v87, %v95
  %v105 = vmul.f32 %v88, %v96
  %v106 = vmul.f32 %v89, %v97
  %v107 = vmul.f32 %v90, %v98
  %v108 = vadd.f32 %v100, %v101
  %v109 = vadd.f32 %v108, %v102
  %v110 = vadd.f32 %v109, %v103
  %v111 = vadd.f32 %v110, %v104
  %v112 = vadd.f32 %v111, %v105
  %v113 = vadd.f32 %v112, %v106
  %v114 = vadd.f32 %v113, %v107
  %v115 = vadd.f32 %v99, %v114
  %116 = vst [vmem:[%s2] sm:$0xff] %v115
  %v117 = vld [vmem:[%s3] sm:$0xff]
  %v118 = vadd.f32 %v83, %v84
  %v119 = vadd.f32 %v118, %v85
  %v120 = vadd.f32 %v119, %v86
  %v121 = vadd.f32 %v120, %v87
  %v122 = vadd.f32 %v121, %v88
  %v123 = vadd.f32 %v122, %v89
  %v124 = vadd.f32 %v123, %v90
  %v125 = vadd.f32 %v91, %v92
  %v126 = vadd.f32 %v125, %v93
  %v127 = vadd.f32 %v126, %v94
  %v128 = vadd.f32 %v127, %v95
  %v129 = vadd.f32 %v128, %v96
  %v130 = vadd.f32 %v129, %v97
  %v131 = vadd.f32 %v130, %v98
  %v132 = vadd.f32 %v124, %v131
  %v133 = vadd.f32 %v117, %v132
  %134 = vst [vmem:[%s3] sm:$0xff] %v133
  // Predicated region
  $region14: #{dice_loss_v2.1} parent=0 // pred_check
    _
  $region15: #{dice_loss_v2.1} parent=0 // pred_check_branch
    %136 = sbr.rel (0) target = $region17
  $region16: #{dice_loss_v2.1} parent=0 // pred_region
    _
  $region17: #{dice_loss_v2.1} parent=0 // pred_fallthru
    _
  // Predicated region
  $region18: #{dice_loss_v2.1} parent=0 // pred_check
    _
  $region19: #{dice_loss_v2.1} parent=0 // pred_check_branch
    %138 = sbr.rel (0) target = $region21
  $region20: #{dice_loss_v2.1} parent=0 // pred_region
    _
  $region21: #{dice_loss_v2.1} parent=0 // pred_fallthru
    _
  // Predicated region
  $region22: #{dice_loss_v2.1} parent=0 // pred_check
    _
  $region23: #{dice_loss_v2.1} parent=0 // pred_check_branch
    %140 = sbr.rel (0) target = $region25
  $region24: #{dice_loss_v2.1} parent=0 // pred_region
    _
  $region25: #{dice_loss_v2.1} parent=0 // pred_fallthru
    _
  // Predicated region
  $region26: #{dice_loss_v2.1} parent=0 // pred_check
    _
  $region27: #{dice_loss_v2.1} parent=0 // pred_check_branch
    %142 = sbr.rel (0) target = $region29
  $region28: #{dice_loss_v2.1} parent=0 // pred_region
    _
  $region29: #{dice_loss_v2.1} parent=0 // pred_fallthru
    _

</llo_original>
